<compile_context>
chip_gen: v7x
topology: tpu7x:2x2x1
jax: 0.10.0
libtpu: 0.0.40
codegen_flags: <defaults>
</compile_context>

<pallas_src>
import functools

import jax
import jax.numpy as jnp
from jax.experimental import pallas as pl
from jax.experimental.pallas import tpu as pltpu


def _nfm_kernel(x_ref, wcat_ref, bcat_ref, w2_ref, b2_ref,
                comb_ref, lin_ref, inter_ref, wt_ref, *, k_dim, out_dim):
    K, O = k_dim, out_dim
    x = x_ref[...]

    # One wide GEMM: x @ [emb@W1^T | W_lin^T | emb] + [b1 | b_lin | 0]
    #   -> [h_pre | linear_out | weighted]            (f32 accumulation)
    lw = jnp.dot(x, wcat_ref[...], preferred_element_type=jnp.float32)
    lw = lw + bcat_ref[...]

    h_pre = lw[:, :K]                  # lane 0 .. K-1 -> feeds the next GEMM
    linear_out = lw[:, K:K + O]
    weighted = lw[:, K + O:]

    # Remaining interaction GEMM: relu(h_pre) @ W2^T + b2   (f32 accumulation)
    h = jnp.maximum(h_pre, 0.0)
    inter = jnp.dot(h.astype(w2_ref.dtype), w2_ref[...],
                    preferred_element_type=jnp.float32) + b2_ref[...]

    comb_ref[...] = (linear_out + inter).astype(comb_ref.dtype)
    lin_ref[...] = linear_out.astype(lin_ref.dtype)
    inter_ref[...] = inter.astype(inter_ref.dtype)
    wt_ref[...] = weighted.astype(wt_ref.dtype)


def _lane_pad(n):
    return (n + 127) // 128 * 128


_VMEM_LIMIT_BYTES = 48 * 1024 * 1024    # safe on v7x (64 MiB/TC) and v5e/v6e
_TILE_BUDGET_BYTES = 40 * 1024 * 1024   # headroom under the scoped limit


def _pick_batch_tile(batch, num_features, out_dim, k_dim, x_itemsize):
    """Largest batch tile (multiple of 8) whose double-buffered x/output tiles
    plus the VMEM-resident weights fit the budget (lane-padding aware)."""
    x_row = _lane_pad(num_features) * x_itemsize
    out_row = (3 * _lane_pad(out_dim) + _lane_pad(k_dim)) * 4   # 4 f32 outputs
    per_row = 2 * (x_row + out_row)                             # double-buffered

    wcat_cols = _lane_pad(2 * k_dim + out_dim)
    weight_bytes = 2 * 4 * (                                    # 2x safety
        max(num_features, 8) * wcat_cols        # [emb@W1^T | W_lin^T | emb]
        + 8 * wcat_cols                         # bcat (pads to 8 sublanes)
        + max(k_dim, 8) * _lane_pad(out_dim)    # W2^T
        + 8 * _lane_pad(out_dim))               # b2

    tb = (_TILE_BUDGET_BYTES - weight_bytes) // max(per_row, 1)
    tb = int(min(tb, 16384))
    tb = max(8, (tb // 8) * 8)
    if batch <= tb:
        # Whole batch fits one tile.  Split into two grid steps when large
        # enough so the "parallel" axis can shard across v7x's 2 TensorCores.
        if batch >= 256 and batch % 16 == 0:
            return batch // 2
        return batch
    return tb


def nfm_forward(x, emb_weight, w_lin, b_lin, w1, b1, w2, b2,
                compute_dtype=None):
    """x: (B, F). emb_weight: (F, K). w_lin: (O, F). w1: (K, K). w2: (O, K).

    Returns (combined, linear_out, interaction_out, weighted_embeddings),
    matching NeuralFactorizationModel.forward.
    """
    B, F = x.shape
    K = emb_weight.shape[1]
    O = w_lin.shape[0]

    # Wrapper-side weight plumbing (weights only, no per-row compute):
    #   wcat = [emb @ W1^T | W_lin^T | emb]   (F, K + O + K)
    #   bcat = [b1 | b_lin | 0_K]             (1, K + O + K)
    wcat = jnp.concatenate([emb_weight @ w1.T, w_lin.T, emb_weight], axis=1)
    bcat = jnp.concatenate(
        [b1, b_lin, jnp.zeros((K,), b_lin.dtype)]).reshape(1, 2 * K + O)
    w2_t = w2.T                              # (K, O)
    b2_2 = b2.reshape(1, O)

    if compute_dtype is not None:            # e.g. jnp.bfloat16 on v6e/v7x
        x = x.astype(compute_dtype)
        wcat = wcat.astype(compute_dtype)
        w2_t = w2_t.astype(compute_dtype)
        # Biases stay f32: accumulation + all elementwise stay f32 (v5e-safe).

    tb = _pick_batch_tile(B, F, O, K, x.dtype.itemsize)
    bp = ((B + tb - 1) // tb) * tb
    if bp != B:                              # ragged tail: zero-pad, slice back
        x = jnp.pad(x, ((0, bp - B), (0, 0)))
    grid = (bp // tb,)

    def tiled(width):       # batch-tiled operand / result
        return pl.BlockSpec((tb, width), lambda i: (i, 0))

    def resident(shape):    # weights / biases: same block every step
        return pl.BlockSpec(shape, lambda i: (0, 0))

    cost = pl.CostEstimate(
        flops=2 * bp * (F * (2 * K + O) + K * O),
        transcendentals=0,
        bytes_accessed=(bp * F * x.dtype.itemsize
                        + bp * (3 * O + K) * 4
                        + (F * (2 * K + O) + K * O) * wcat.dtype.itemsize))

    outs = pl.pallas_call(
        functools.partial(_nfm_kernel, k_dim=K, out_dim=O),
        out_shape=(jax.ShapeDtypeStruct((bp, O), jnp.float32),   # combined
                   jax.ShapeDtypeStruct((bp, O), jnp.float32),   # linear
                   jax.ShapeDtypeStruct((bp, O), jnp.float32),   # interaction
                   jax.ShapeDtypeStruct((bp, K), jnp.float32)),  # weighted
        grid=grid,
        in_specs=[
            tiled(F),                        # x
            resident((F, 2 * K + O)),        # [emb@W1^T | W_lin^T | emb]
            resident((1, 2 * K + O)),        # [b1 | b_lin | 0]
            resident((K, O)),                # W2^T
            resident((1, O)),                # b2
        ],
        out_specs=(tiled(O), tiled(O), tiled(O), tiled(K)),
        compiler_params=pltpu.CompilerParams(
            dimension_semantics=("parallel",),
            vmem_limit_bytes=_VMEM_LIMIT_BYTES,
        ),
        cost_estimate=cost,
    )(x, wcat, bcat, w2_t, b2_2)

    combined, linear_out, inter, weighted = outs
    if bp != B:
        combined = combined[:B]
        linear_out = linear_out[:B]
        inter = inter[:B]
        weighted = weighted[:B]
    return combined, linear_out, inter, weighted


def nfm_reference(x, emb_weight, w_lin, b_lin, w1, b1, w2, b2):
    linear_out = x @ w_lin.T + b_lin
    weighted = x @ emb_weight
    h = jnp.maximum(weighted @ w1.T + b1, 0.0)
    inter = h @ w2.T + b2
    return linear_out + inter, linear_out, inter, weighted


if __name__ == "__main__":
    # Small, module-consistent shapes.
    batch = 4
    num_features = 32
    k_dim = 16
    output_dim = 8

    key = jax.random.PRNGKey(0)
    keys = jax.random.split(key, 8)

    x = jax.random.normal(keys[0], (batch, num_features), dtype=jnp.float32)
    emb_weight = jax.random.normal(keys[1], (num_features, k_dim), jnp.float32) * 0.1
    w_lin = jax.random.normal(keys[2], (output_dim, num_features), jnp.float32) * 0.1
    b_lin = jax.random.normal(keys[3], (output_dim,), jnp.float32) * 0.1
    w1 = jax.random.normal(keys[4], (k_dim, k_dim), jnp.float32) * 0.1
    b1 = jax.random.normal(keys[5], (k_dim,), jnp.float32) * 0.1
    w2 = jax.random.normal(keys[6], (output_dim, k_dim), jnp.float32) * 0.1
    b2 = jax.random.normal(keys[7], (output_dim,), jnp.float32) * 0.1

    outs = nfm_forward(x, emb_weight, w_lin, b_lin, w1, b1, w2, b2)
    outs = jax.block_until_ready(outs)

    refs = nfm_reference(x, emb_weight, w_lin, b_lin, w1, b1, w2, b2)
    for o, r in zip(outs, refs):
        assert o.shape == r.shape and o.dtype == r.dtype, (o.shape, r.shape)
        assert jnp.allclose(o, r, atol=1e-4, rtol=1e-4)

    print("KERNEL_OK")
</pallas_src>

<mosaic_0001>
module attributes {stable_mosaic.version = 11 : i64} {
  func.func @_nfm_kernel(%arg0: i32, %arg1: memref<4x32xf32, #tpu.memory_space<vmem>>, %arg2: memref<32x40xf32, #tpu.memory_space<vmem>>, %arg3: memref<1x40xf32, #tpu.memory_space<vmem>>, %arg4: memref<16x8xf32, #tpu.memory_space<vmem>>, %arg5: memref<1x8xf32, #tpu.memory_space<vmem>>, %arg6: memref<4x8xf32, #tpu.memory_space<vmem>>, %arg7: memref<4x8xf32, #tpu.memory_space<vmem>>, %arg8: memref<4x8xf32, #tpu.memory_space<vmem>>, %arg9: memref<4x16xf32, #tpu.memory_space<vmem>>) attributes {dimension_semantics = [#tpu.dimension_semantics<parallel>], iteration_bounds = array<i64: 1>, scalar_prefetch = 0 : i64, scratch_operands = 0 : i64, tpu.core_type = #tpu.core_type<tc>, window_params = [{transform_indices = @transform_0, window_bounds = array<i64: 4, 32>}, {pipeline_mode = #tpu.pipeline_mode<synchronous>, transform_indices = @transform_1, window_bounds = array<i64: 32, 40>}, {pipeline_mode = #tpu.pipeline_mode<synchronous>, transform_indices = @transform_2, window_bounds = array<i64: 1, 40>}, {pipeline_mode = #tpu.pipeline_mode<synchronous>, transform_indices = @transform_3, window_bounds = array<i64: 16, 8>}, {pipeline_mode = #tpu.pipeline_mode<synchronous>, transform_indices = @transform_4, window_bounds = array<i64: 1, 8>}, {transform_indices = @transform_5, window_bounds = array<i64: 4, 8>}, {transform_indices = @transform_6, window_bounds = array<i64: 4, 8>}, {transform_indices = @transform_7, window_bounds = array<i64: 4, 8>}, {transform_indices = @transform_8, window_bounds = array<i64: 4, 16>}]} {
    %c0 = arith.constant 0 : index
    %c0_0 = arith.constant 0 : index
    %0 = vector.load %arg1[%c0, %c0_0] : memref<4x32xf32, #tpu.memory_space<vmem>>, vector<4x32xf32>
    %c0_1 = arith.constant 0 : index
    %c0_2 = arith.constant 0 : index
    %1 = vector.load %arg2[%c0_1, %c0_2] : memref<32x40xf32, #tpu.memory_space<vmem>>, vector<32x40xf32>
    %cst = arith.constant dense<0.000000e+00> : vector<4x40xf32>
    %2 = tpu.matmul %0, %1, %cst {dimension_numbers = #tpu.dot_dimension_numbers<[1], [0], [0], [1], [0, 0, 1, 1], [], []>} : vector<4x32xf32>, vector<32x40xf32>, vector<4x40xf32> -> vector<4x40xf32>
    %c0_3 = arith.constant 0 : index
    %c0_4 = arith.constant 0 : index
    %3 = vector.load %arg3[%c0_3, %c0_4] : memref<1x40xf32, #tpu.memory_space<vmem>>, vector<1x40xf32>
    %4 = vector.broadcast %3 : vector<1x40xf32> to vector<4x40xf32>
    %5 = arith.addf %2, %4 : vector<4x40xf32>
    %6 = vector.extract_strided_slice %5 {offsets = [0, 0], sizes = [4, 16], strides = [1, 1]} : vector<4x40xf32> to vector<4x16xf32>
    %7 = vector.extract_strided_slice %5 {offsets = [0, 16], sizes = [4, 8], strides = [1, 1]} : vector<4x40xf32> to vector<4x8xf32>
    %8 = vector.extract_strided_slice %5 {offsets = [0, 24], sizes = [4, 16], strides = [1, 1]} : vector<4x40xf32> to vector<4x16xf32>
    %cst_5 = arith.constant 0.000000e+00 : f32
    %9 = vector.broadcast %cst_5 : f32 to vector<4x16xf32>
    %10 = arith.maximumf %6, %9 : vector<4x16xf32>
    %c0_6 = arith.constant 0 : index
    %c0_7 = arith.constant 0 : index
    %11 = vector.load %arg4[%c0_6, %c0_7] : memref<16x8xf32, #tpu.memory_space<vmem>>, vector<16x8xf32>
    %cst_8 = arith.constant dense<0.000000e+00> : vector<4x8xf32>
    %12 = tpu.matmul %10, %11, %cst_8 {dimension_numbers = #tpu.dot_dimension_numbers<[1], [0], [0], [1], [0, 0, 1, 1], [], []>} : vector<4x16xf32>, vector<16x8xf32>, vector<4x8xf32> -> vector<4x8xf32>
    %c0_9 = arith.constant 0 : index
    %c0_10 = arith.constant 0 : index
    %13 = vector.load %arg5[%c0_9, %c0_10] : memref<1x8xf32, #tpu.memory_space<vmem>>, vector<1x8xf32>
    %14 = vector.broadcast %13 : vector<1x8xf32> to vector<4x8xf32>
    %15 = arith.addf %12, %14 : vector<4x8xf32>
    %16 = arith.addf %7, %15 : vector<4x8xf32>
    %c0_11 = arith.constant 0 : index
    %c0_12 = arith.constant 0 : index
    %17 = vector.load %arg6[%c0_11, %c0_12] : memref<4x8xf32, #tpu.memory_space<vmem>>, vector<4x8xf32>
    tpu.vector_store %arg6[%c0_11, %c0_12], %16 {strides = array<i32>} : memref<4x8xf32, #tpu.memory_space<vmem>>, vector<4x8xf32>,
    %c0_13 = arith.constant 0 : index
    %c0_14 = arith.constant 0 : index
    %18 = vector.load %arg7[%c0_13, %c0_14] : memref<4x8xf32, #tpu.memory_space<vmem>>, vector<4x8xf32>
    tpu.vector_store %arg7[%c0_13, %c0_14], %7 {strides = array<i32>} : memref<4x8xf32, #tpu.memory_space<vmem>>, vector<4x8xf32>,
    %c0_15 = arith.constant 0 : index
    %c0_16 = arith.constant 0 : index
    %19 = vector.load %arg8[%c0_15, %c0_16] : memref<4x8xf32, #tpu.memory_space<vmem>>, vector<4x8xf32>
    tpu.vector_store %arg8[%c0_15, %c0_16], %15 {strides = array<i32>} : memref<4x8xf32, #tpu.memory_space<vmem>>, vector<4x8xf32>,
    %c0_17 = arith.constant 0 : index
    %c0_18 = arith.constant 0 : index
    %20 = vector.load %arg9[%c0_17, %c0_18] : memref<4x16xf32, #tpu.memory_space<vmem>>, vector<4x16xf32>
    tpu.vector_store %arg9[%c0_17, %c0_18], %8 {strides = array<i32>} : memref<4x16xf32, #tpu.memory_space<vmem>>, vector<4x16xf32>,
    return
  }
  func.func @transform_0(%arg0: i32) -> (i32, i32) {
    %c0_i32 = arith.constant 0 : i32
    %c0_i32_0 = arith.constant 0 : i32
    return %arg0, %c0_i32 : i32, i32
  }
  func.func @transform_1(%arg0: i32) -> (i32, i32) {
    %c0_i32 = arith.constant 0 : i32
    %c0_i32_0 = arith.constant 0 : i32
    %c0_i32_1 = arith.constant 0 : i32
    return %c0_i32, %c0_i32_0 : i32, i32
  }
  func.func @transform_2(%arg0: i32) -> (i32, i32) {
    %c0_i32 = arith.constant 0 : i32
    %c0_i32_0 = arith.constant 0 : i32
    %c0_i32_1 = arith.constant 0 : i32
    return %c0_i32, %c0_i32_0 : i32, i32
  }
  func.func @transform_3(%arg0: i32) -> (i32, i32) {
    %c0_i32 = arith.constant 0 : i32
    %c0_i32_0 = arith.constant 0 : i32
    %c0_i32_1 = arith.constant 0 : i32
    return %c0_i32, %c0_i32_0 : i32, i32
  }
  func.func @transform_4(%arg0: i32) -> (i32, i32) {
    %c0_i32 = arith.constant 0 : i32
    %c0_i32_0 = arith.constant 0 : i32
    %c0_i32_1 = arith.constant 0 : i32
    return %c0_i32, %c0_i32_0 : i32, i32
  }
  func.func @transform_5(%arg0: i32) -> (i32, i32) {
    %c0_i32 = arith.constant 0 : i32
    %c0_i32_0 = arith.constant 0 : i32
    return %arg0, %c0_i32 : i32, i32
  }
  func.func @transform_6(%arg0: i32) -> (i32, i32) {
    %c0_i32 = arith.constant 0 : i32
    %c0_i32_0 = arith.constant 0 : i32
    return %arg0, %c0_i32 : i32, i32
  }
  func.func @transform_7(%arg0: i32) -> (i32, i32) {
    %c0_i32 = arith.constant 0 : i32
    %c0_i32_0 = arith.constant 0 : i32
    return %arg0, %c0_i32 : i32, i32
  }
  func.func @transform_8(%arg0: i32) -> (i32, i32) {
    %c0_i32 = arith.constant 0 : i32
    %c0_i32_0 = arith.constant 0 : i32
    return %arg0, %c0_i32 : i32, i32
  }
}

</mosaic_0001>

<llo_original>
// kernel: tpu_custom_call.1
$region0: #{tpu_custom_call.1}
  #allocation0 [shape = 'u32[]', space=smem, size = 0x4, offset = 0x4, fixed_abs, tag = 'smem constant byte address 0x4 - core index']
  #allocation1 [shape = 'u32[144,128]{1,0:T(1,128)}', space=vmem, size = 0x12000, scoped, tag = 'internal scratch']
  %s0 = inlined_call_operand.vmem [shape: f32[4,32], index: 0, kind: input, shape index: {}]
  %s1 = inlined_call_operand.hbm [shape: f32[32,40], index: 1, kind: input, shape index: {}]
  %s2 = inlined_call_operand.vmem [shape: f32[1,40], index: 2, kind: input, shape index: {}]
  %s3 = inlined_call_operand.vmem [shape: f32[16,8], index: 3, kind: input, shape index: {}]
  %s4 = inlined_call_operand.vmem [shape: f32[1,8], index: 4, kind: input, shape index: {}]
  %s5 = inlined_call_operand.hbm [shape: f32[4,8], index: 5, kind: output, shape index: {0}]
  %s6 = inlined_call_operand.hbm [shape: f32[4,8], index: 6, kind: output, shape index: {1}]
  %s7 = inlined_call_operand.hbm [shape: f32[4,8], index: 7, kind: output, shape index: {2}]
  %s8 = inlined_call_operand.hbm [shape: f32[4,16], index: 8, kind: output, shape index: {3}]
  %9 = xla_tuple %s5, %s6, %s7, %s8
  %s10 = sld [smem:[#allocation0]]
  $region58: #{tpu_custom_call.1} parent=0
    _
  %s12 = ssub.s32 1, %s10
  %s13 = scalar_select 0, %s12, %s10
  $region1: #{tpu_custom_call.1} parent=0
    #allocation2 [shape = 'u8[16384]{0}', space=vmem, size = 0x4000, scoped, tag = 'input window, operand 1, single buffered']
    #allocation3 [shape = 's32[1]{0}', space=sflag, size = 0x4, scoped, tag = 'scoped memory for tpu_custom_call.1']
    #allocation4 [shape = 's32[1]{0}', space=sflag, size = 0x4, scoped, tag = 'scoped memory for tpu_custom_call.1']
    #allocation5 [shape = 'u8[2048]{0}', space=vmem, size = 0x800, scoped, tag = 'output window, operand 0, single buffered']
    #allocation6 [shape = 'u8[2048]{0}', space=vmem, size = 0x800, scoped, tag = 'output window, operand 1, single buffered']
    #allocation7 [shape = 's32[1]{0}', space=sflag, size = 0x4, scoped, tag = 'scoped memory for tpu_custom_call.1']
    #allocation8 [shape = 'u8[2048]{0}', space=vmem, size = 0x800, scoped, tag = 'output window, operand 2, single buffered']
    #allocation9 [shape = 'u8[2048]{0}', space=vmem, size = 0x800, scoped, tag = 'output window, operand 3, single buffered']
    #allocation10 [shape = 's32[1]{0}', space=sflag, size = 0x4, scoped, tag = 'scoped memory for tpu_custom_call.1']
    %14 = vsyncpa [#allocation3], 0
    %15 = vsyncpa [#allocation4], 0
    %16 = vsyncpa [#allocation7], 0
    %17 = vsyncpa [#allocation10], 0
    // Predicated region
    $region2: #{tpu_custom_call.1} parent=1 // pred_check
      _
    $region3: #{tpu_custom_call.1} parent=1 // pred_check_branch
      %19 = sbr.rel (0) target = $region5
    $region4: #{tpu_custom_call.1} parent=1 // pred_region
      _
    $region5: #{tpu_custom_call.1} parent=1 // pred_fallthru
      _
    // Predicated region
    $region6: #{tpu_custom_call.1} parent=1 // pred_check
      _
    $region7: #{tpu_custom_call.1} parent=1 // pred_check_branch
      %21 = sbr.rel (0) target = $region9
    $region8: #{tpu_custom_call.1} parent=1 // pred_region
      %s23 = ssub.s32 512, 512
      %24 = vsyncadd [#allocation3], %s23
      %s25 = sshll.u32 [#allocation2], 4
      %s26 = int_to_ptr.vmem [resolvable:$true] %s25
      %31 = dma.hbm_to_vmem [thread:$0]  %s1, 512, %s26, [#allocation3], 128, 128, 8
    $region9: #{tpu_custom_call.1} parent=1 // pred_fallthru
      _
    // Predicated region
    $region10: #{tpu_custom_call.1} parent=1 // pred_check
      _
    $region11: #{tpu_custom_call.1} parent=1 // pred_check_branch
      %33 = sbr.rel (0) target = $region13
    $region12: #{tpu_custom_call.1} parent=1 // pred_region
      _
    $region13: #{tpu_custom_call.1} parent=1 // pred_fallthru
      _
    // Predicated region
    $region14: #{tpu_custom_call.1} parent=1 // pred_check
      _
    $region15: #{tpu_custom_call.1} parent=1 // pred_check_branch
      %35 = sbr.rel (0) target = $region17
    $region16: #{tpu_custom_call.1} parent=1 // pred_region
      _
    $region17: #{tpu_custom_call.1} parent=1 // pred_fallthru
      _
    // Predicated region
    $region18: #{tpu_custom_call.1} parent=1 // pred_check
      _
    $region19: #{tpu_custom_call.1} parent=1 // pred_check_branch
      %37 = sbr.rel (0) target = $region21
    $region20: #{tpu_custom_call.1} parent=1 // pred_region
      _
    $region21: #{tpu_custom_call.1} parent=1 // pred_fallthru
      _
    // Predicated region
    $region22: #{tpu_custom_call.1} parent=1 // pred_check
      _
    $region23: #{tpu_custom_call.1} parent=1 // pred_check_branch
      %39 = sbr.rel (0) target = $region25
    $region24: #{tpu_custom_call.1} parent=1 // pred_region
      %40 = dma.done [#allocation3], 512
    $region25: #{tpu_custom_call.1} parent=1 // pred_fallthru
      _
    %v41 = vld [vmem:[%s0] sm:$0xf]
    %v42 = vld [vmem:[#allocation2] sm:$0xff]
    %v43 = vld [vmem:[#allocation2 + $0x8] sm:$0xff]
    %v44 = vld [vmem:[#allocation2 + $0x10] sm:$0xff]
    %v45 = vld [vmem:[#allocation2 + $0x18] sm:$0xff]
    %v46 = vld [vmem:[%s2] sm:$0x1]
    %v48 = vlaneseq
    %v49 = vshrl.u32 %v48, 7
    %v50 = vsub.s32 0, %v49
    %v51 = vrot.slane %v46, %v50
    %vm53 = vcmask 261120
    %v55 = vsel %vm53, %v41, 0
    %57 = vmatprep.subr.mxu0 0.0
    %58 = vmatpush1.msra.mxu0 %v42
    %59 = vmatprep.subr.mxu0 0.0
    %60 = vmatpush1.msra.mxu0 %v43
    %61 = vmatprep.subr.mxu0 0.0
    %62 = vmatpush1.msra.mxu0 %v44
    %63 = vmatprep.subr.mxu0 0.0
    %64 = vmatpush1.msra.mxu0 %v45
    %65 = vmatprep.subr.mxu0 0.0
    %66 = vmatpush1.msra.mxu0 0.0
    %67 = vmatprep.subr.mxu0 0.0
    %68 = vmatpush1.msra.mxu0 0.0
    %69 = vmatprep.subr.mxu0 0.0
    %70 = vmatpush1.msra.mxu0 0.0
    %71 = vmatprep.subr.mxu0 0.0
    %72 = vmatpush1.msra.mxu0 0.0
    %73 = vmatprep.subr.mxu0 0.0
    %74 = vmatpush1.msra.mxu0 0.0
    %75 = vmatprep.subr.mxu0 0.0
    %76 = vmatpush1.msra.mxu0 0.0
    %77 = vmatprep.subr.mxu0 0.0
    %78 = vmatpush1.msra.mxu0 0.0
    %79 = vmatprep.subr.mxu0 0.0
    %80 = vmatpush1.msra.mxu0 0.0
    %81 = vmatprep.subr.mxu0 0.0
    %82 = vmatpush1.msra.mxu0 0.0
    %83 = vmatprep.subr.mxu0 0.0
    %84 = vmatpush1.msra.mxu0 0.0
    %85 = vmatprep.subr.mxu0 0.0
    %86 = vmatpush1.msra.mxu0 0.0
    %87 = vmatprep.subr.mxu0 0.0
    %88 = vmatpush1.msra.mxu0 0.0
    %89 = vmatprep.subr.mxu0 0.0
    %90 = vmatpush1.msra.mxu0 0.0
    %91 = vmatprep.subr.mxu0 0.0
    %92 = vmatpush1.msra.mxu0 0.0
    %93 = vmatprep.subr.mxu0 0.0
    %94 = vmatpush1.msra.mxu0 0.0
    %95 = vmatprep.subr.mxu0 0.0
    %96 = vmatpush1.msra.mxu0 0.0
    %97 = vmatprep.subr.mxu0 0.0
    %98 = vmatpush1.msra.mxu0 0.0
    %99 = vmatprep.subr.mxu0 0.0
    %100 = vmatpush1.msra.mxu0 0.0
    %101 = vmatprep.subr.mxu0 0.0
    %102 = vmatpush1.msra.mxu0 0.0
    %103 = vmatprep.subr.mxu0 0.0
    %104 = vmatpush1.msra.mxu0 0.0
    %105 = vmatprep.subr.mxu0 0.0
    %106 = vmatpush1.msra.mxu0 0.0
    %107 = vmatprep.subr.mxu0 0.0
    %108 = vmatpush1.msra.mxu0 0.0
    %109 = vmatprep.subr.mxu0 0.0
    %110 = vmatpush1.msra.mxu0 0.0
    %111 = vmatprep.subr.mxu0 0.0
    %112 = vmatpush1.msra.mxu0 0.0
    %113 = vmatprep.subr.mxu0 0.0
    %114 = vmatpush1.msra.mxu0 0.0
    %115 = vmatprep.subr.mxu0 0.0
    %116 = vmatpush1.msra.mxu0 0.0
    %117 = vmatprep.subr.mxu0 0.0
    %118 = vmatpush1.msra.mxu0 0.0
    %119 = vmatprep.subr.mxu0 0.0
    %120 = vmatpush1.msra.mxu0 0.0
    %121 = vmatprep.mubr.f32.mxu0 0.0
    %122 = vmatmul.mubr.f32.gmra.mrb[0].mxu0 %v55
    %v123 = vpop.f32.mrb[0].mxu0
    %v124 = vadd.f32 %v51, %v123
    %v125 = vpop.f32.mrb[0].mxu0
    %126 = vdwg.mxu0
    %v127 = vmax.f32 %v124, 0.0
    %v128 = vld [vmem:[%s3] sm:$0xff]
    %v129 = vld [vmem:[%s3 + $0x8] sm:$0xff]
    %v130 = vld [vmem:[%s4] sm:$0x1]
    %v132 = vlaneseq
    %v133 = vshrl.u32 %v132, 7
    %v134 = vsub.s32 0, %v133
    %v135 = vrot.slane %v130, %v134
    %vm137 = vcmask 130048
    %v139 = vsel %vm137, %v127, 0
    %141 = vmatprep.subr.mxu0 0.0
    %142 = vmatpush1.msra.mxu0 %v128
    %143 = vmatprep.subr.mxu0 0.0
    %144 = vmatpush1.msra.mxu0 %v129
    %145 = vmatprep.subr.mxu0 0.0
    %146 = vmatpush1.msra.mxu0 0.0
    %147 = vmatprep.subr.mxu0 0.0
    %148 = vmatpush1.msra.mxu0 0.0
    %149 = vmatprep.subr.mxu0 0.0
    %150 = vmatpush1.msra.mxu0 0.0
    %151 = vmatprep.subr.mxu0 0.0
    %152 = vmatpush1.msra.mxu0 0.0
    %153 = vmatprep.subr.mxu0 0.0
    %154 = vmatpush1.msra.mxu0 0.0
    %155 = vmatprep.subr.mxu0 0.0
    %156 = vmatpush1.msra.mxu0 0.0
    %157 = vmatprep.subr.mxu0 0.0
    %158 = vmatpush1.msra.mxu0 0.0
    %159 = vmatprep.subr.mxu0 0.0
    %160 = vmatpush1.msra.mxu0 0.0
    %161 = vmatprep.subr.mxu0 0.0
    %162 = vmatpush1.msra.mxu0 0.0
    %163 = vmatprep.subr.mxu0 0.0
    %164 = vmatpush1.msra.mxu0 0.0
    %165 = vmatprep.subr.mxu0 0.0
    %166 = vmatpush1.msra.mxu0 0.0
    %167 = vmatprep.subr.mxu0 0.0
    %168 = vmatpush1.msra.mxu0 0.0
    %169 = vmatprep.subr.mxu0 0.0
    %170 = vmatpush1.msra.mxu0 0.0
    %171 = vmatprep.subr.mxu0 0.0
    %172 = vmatpush1.msra.mxu0 0.0
    %173 = vmatprep.subr.mxu0 0.0
    %174 = vmatpush1.msra.mxu0 0.0
    %175 = vmatprep.subr.mxu0 0.0
    %176 = vmatpush1.msra.mxu0 0.0
    %177 = vmatprep.subr.mxu0 0.0
    %178 = vmatpush1.msra.mxu0 0.0
    %179 = vmatprep.subr.mxu0 0.0
    %180 = vmatpush1.msra.mxu0 0.0
    %181 = vmatprep.subr.mxu0 0.0
    %182 = vmatpush1.msra.mxu0 0.0
    %183 = vmatprep.subr.mxu0 0.0
    %184 = vmatpush1.msra.mxu0 0.0
    %185 = vmatprep.subr.mxu0 0.0
    %186 = vmatpush1.msra.mxu0 0.0
    %187 = vmatprep.subr.mxu0 0.0
    %188 = vmatpush1.msra.mxu0 0.0
    %189 = vmatprep.subr.mxu0 0.0
    %190 = vmatpush1.msra.mxu0 0.0
    %191 = vmatprep.subr.mxu0 0.0
    %192 = vmatpush1.msra.mxu0 0.0
    %193 = vmatprep.subr.mxu0 0.0
    %194 = vmatpush1.msra.mxu0 0.0
    %195 = vmatprep.subr.mxu0 0.0
    %196 = vmatpush1.msra.mxu0 0.0
    %197 = vmatprep.subr.mxu0 0.0
    %198 = vmatpush1.msra.mxu0 0.0
    %199 = vmatprep.subr.mxu0 0.0
    %200 = vmatpush1.msra.mxu0 0.0
    %201 = vmatprep.subr.mxu0 0.0
    %202 = vmatpush1.msra.mxu0 0.0
    %203 = vmatprep.subr.mxu0 0.0
    %204 = vmatpush1.msra.mxu0 0.0
    %205 = vmatprep.mubr.f32.mxu0 0.0
    %206 = vmatmul.mubr.f32.gmra.mrb[0].mxu0 %v139
    %v207 = vpop.f32.mrb[0].mxu0
    %v208 = vadd.f32 %v135, %v207
    %v209 = vpop.f32.mrb[0].mxu0
    %210 = vdwg.mxu0
    %212 = vrot.lane.b32.xlu0 %v208, 16
    %v213 = vpop.permute.xlu0 %212
    %v215 = vadd.f32 %v124, %v213
    %217 = vrot.lane.b32.xlu0 %v215, 112
    %v218 = vpop.permute.xlu0 %217
    %vm220 = vcmask 60416
    %221 = vst.msk [vmem:[#allocation5] sm:$0xf] %vm220, %v218
    %223 = vrot.lane.b32.xlu0 %v124, 112
    %v224 = vpop.permute.xlu0 %223
    %226 = vst.msk [vmem:[#allocation6] sm:$0xf] %vm220, %v224
    %227 = vst.msk [vmem:[#allocation8] sm:$0xf] %vm220, %v208
    %228 = vrot.lane.b32.xlu0 %v124, 104
    %v229 = vpop.permute.xlu0 %228
    %vm231 = vcmask 125952
    %232 = vst.msk [vmem:[#allocation9] sm:$0xf] %vm231, %v229
    // Predicated region
    $region26: #{tpu_custom_call.1} parent=1 // pred_check
      _
    $region27: #{tpu_custom_call.1} parent=1 // pred_check_branch
      %234 = sbr.rel (0) target = $region29
    $region28: #{tpu_custom_call.1} parent=1 // pred_region
      %s236 = ssub.s32 64, 64
      %237 = vsyncadd [#allocation4], %s236
      %s239 = sshll.u32 [#allocation5], 4
      %s240 = int_to_ptr.vmem [resolvable:$true] %s239
      %242 = dma.vmem_to_hbm [thread:$0]  %s240, 64, %s5, [#allocation4]
    $region29: #{tpu_custom_call.1} parent=1 // pred_fallthru
      _
    // Predicated region
    $region30: #{tpu_custom_call.1} parent=1 // pred_check
      _
    $region31: #{tpu_custom_call.1} parent=1 // pred_check_branch
      %244 = sbr.rel (0) target = $region33
    $region32: #{tpu_custom_call.1} parent=1 // pred_region
      %s246 = ssub.s32 64, 64
      %247 = vsyncadd [#allocation7], %s246
      %s249 = sshll.u32 [#allocation6], 4
      %s250 = int_to_ptr.vmem [resolvable:$true] %s249
      %252 = dma.vmem_to_hbm [thread:$0]  %s250, 64, %s6, [#allocation7]
    $region33: #{tpu_custom_call.1} parent=1 // pred_fallthru
      _
    // Predicated region
    $region34: #{tpu_custom_call.1} parent=1 // pred_check
      _
    $region35: #{tpu_custom_call.1} parent=1 // pred_check_branch
      %254 = sbr.rel (0) target = $region37
    $region36: #{tpu_custom_call.1} parent=1 // pred_region
      %s256 = ssub.s32 64, 64
      %257 = vsyncadd [#allocation7], %s256
      %s259 = sshll.u32 [#allocation8], 4
      %s260 = int_to_ptr.vmem [resolvable:$true] %s259
      %262 = dma.vmem_to_hbm [thread:$0]  %s260, 64, %s7, [#allocation7]
    $region37: #{tpu_custom_call.1} parent=1 // pred_fallthru
      _
    // Predicated region
    $region38: #{tpu_custom_call.1} parent=1 // pred_check
      _
    $region39: #{tpu_custom_call.1} parent=1 // pred_check_branch
      %264 = sbr.rel (0) target = $region41
    $region40: #{tpu_custom_call.1} parent=1 // pred_region
      %s266 = ssub.s32 64, 64
      %267 = vsyncadd [#allocation10], %s266
      %s269 = sshll.u32 [#allocation9], 4
      %s270 = int_to_ptr.vmem [resolvable:$true] %s269
      %272 = dma.vmem_to_hbm [thread:$0]  %s270, 64, %s8, [#allocation10]
    $region41: #{tpu_custom_call.1} parent=1 // pred_fallthru
      _
    // Predicated region
    $region42: #{tpu_custom_call.1} parent=1 // pred_check
      _
    $region43: #{tpu_custom_call.1} parent=1 // pred_check_branch
      %274 = sbr.rel (0) target = $region45
    $region44: #{tpu_custom_call.1} parent=1 // pred_region
      %275 = dma.done [#allocation4], 64
    $region45: #{tpu_custom_call.1} parent=1 // pred_fallthru
      _
    // Predicated region
    $region46: #{tpu_custom_call.1} parent=1 // pred_check
      _
    $region47: #{tpu_custom_call.1} parent=1 // pred_check_branch
      %277 = sbr.rel (0) target = $region49
    $region48: #{tpu_custom_call.1} parent=1 // pred_region
      %278 = dma.done [#allocation7], 64
    $region49: #{tpu_custom_call.1} parent=1 // pred_fallthru
      _
    // Predicated region
    $region50: #{tpu_custom_call.1} parent=1 // pred_check
      _
    $region51: #{tpu_custom_call.1} parent=1 // pred_check_branch
      %280 = sbr.rel (0) target = $region53
    $region52: #{tpu_custom_call.1} parent=1 // pred_region
      %281 = dma.done [#allocation7], 64
    $region53: #{tpu_custom_call.1} parent=1 // pred_fallthru
      _
    // Predicated region
    $region54: #{tpu_custom_call.1} parent=1 // pred_check
      _
    $region55: #{tpu_custom_call.1} parent=1 // pred_check_branch
      %283 = sbr.rel (0) target = $region57
    $region56: #{tpu_custom_call.1} parent=1 // pred_region
      %284 = dma.done [#allocation10], 64
    $region57: #{tpu_custom_call.1} parent=1 // pred_fallthru
      _
    %285 = vsyncpa [#allocation3], 1
    %286 = vsyncpa [#allocation4], 1
    %287 = vsyncpa [#allocation7], 1
    %288 = vsyncpa [#allocation10], 1

</llo_original>
